<compile_context>
chip_gen: v7x
topology: tpu7x:2x2x1
jax: 0.10.0
libtpu: 0.0.40
codegen_flags: <defaults>
</compile_context>

<pallas_src>
import jax
import jax.numpy as jnp
from jax.experimental import pallas as pl
from jax.experimental.pallas import tpu as pltpu

LANES = 128
SUBLANES = 8
MAX_BLOCK_ROWS = 2048   # (2048, 128) f32 block = 1 MiB per input per buffer.
_ROW_ALIGN = 32         # block-row multiple; safe tiling for f32/bf16/f16.


def _cdiv(a, b):
    return -(-a // b)


def _round_up(x, m):
    return _cdiv(x, m) * m


@jax.jit
def _metrics_impl(out, tar):
    """Returns (mae, rmse, r2) as f32 scalars."""
    out = out.reshape(-1)
    tar = tar.reshape(-1)
    if not jnp.issubdtype(out.dtype, jnp.floating):
        out = out.astype(jnp.float32)
    if not jnp.issubdtype(tar.dtype, jnp.floating):
        tar = tar.astype(jnp.float32)
    n = out.shape[0]  # static

    # Numerically stable shift for ss_tot: mean over the first <=1024 targets.
    m0 = min(n, 1024)
    shift = jnp.mean(tar[:m0].astype(jnp.float32)).reshape(1)

    # Pad only up to the next multiple of 128 lanes (<=127 elements); the
    # reshape to (rows, 128) is then a free row-major view.
    rows = _cdiv(n, LANES)
    pad = rows * LANES - n
    if pad:
        out = jnp.pad(out, (0, pad))
        tar = jnp.pad(tar, (0, pad))
    o2 = out.reshape(rows, LANES)
    t2 = tar.reshape(rows, LANES)

    block_rows = min(MAX_BLOCK_ROWS, _round_up(rows, _ROW_ALIGN))
    nb = _cdiv(rows, block_rows)       # number of real row blocks
    ncores = 2 if nb >= 2 else 1       # engage both TensorCores on v7x
    nbpc = _cdiv(nb, ncores)           # blocks per core (last may duplicate)

    def in_index(c, i):
        g = c * nbpc + i
        # Clamp so no DMA is ever fully out of bounds; a clamped duplicate
        # step re-reads the last real block and is fully masked in-kernel.
        return (jnp.minimum(g, nb - 1), 0)

    def kernel(shift_ref, out_ref, tar_ref, acc_ref):
        c = pl.program_id(0)
        i = pl.program_id(1)

        @pl.when(i == 0)
        def _init():
            acc_ref[...] = jnp.zeros_like(acc_ref)

        g = c * nbpc + i                      # UNclamped global block id
        base = g * (block_rows * LANES)       # flat element offset of block

        o = out_ref[...].astype(jnp.float32)
        t = tar_ref[...].astype(jnp.float32)
        sh = shift_ref[0]

        row = jax.lax.broadcasted_iota(jnp.int32, (block_rows, LANES), 0)
        lane = jax.lax.broadcasted_iota(jnp.int32, (block_rows, LANES), 1)
        valid = (base + row * LANES + lane) < n

        d = jnp.where(valid, t - o, 0.0)
        ts = jnp.where(valid, t - sh, 0.0)

        def psum(x):
            # (block_rows,128) -> (8,128): pure vreg-wise VPU adds, no XLU.
            return jnp.sum(
                x.reshape(block_rows // SUBLANES, SUBLANES, LANES), axis=0)

        acc_ref[0] += psum(jnp.abs(d))    # sum |t - o|
        acc_ref[1] += psum(d * d)         # sum (t - o)^2
        acc_ref[2] += psum(ts)            # sum (t - shift)
        acc_ref[3] += psum(ts * ts)       # sum (t - shift)^2

    parts = pl.pallas_call(
        kernel,
        out_shape=jax.ShapeDtypeStruct((ncores, 4, SUBLANES, LANES),
                                       jnp.float32),
        grid_spec=pltpu.PrefetchScalarGridSpec(
            num_scalar_prefetch=0,
            grid=(ncores, nbpc),
            in_specs=[
                pl.BlockSpec(memory_space=pltpu.MemorySpace.SMEM),   # shift
                pl.BlockSpec((block_rows, LANES), in_index),         # out
                pl.BlockSpec((block_rows, LANES), in_index),         # tar
            ],
            out_specs=pl.BlockSpec((None, 4, SUBLANES, LANES),
                                   lambda c, i: (c, 0, 0, 0)),
        ),
        compiler_params=pltpu.CompilerParams(
            dimension_semantics=("parallel", "arbitrary"),
            vmem_limit_bytes=32 * 1024 * 1024),
    )(shift, o2, t2)

    sums = jnp.sum(parts, axis=(0, 2, 3))   # tiny (4,) cross-lane reduce
    sum_abs, ss_res, sum_ts, sum_ts2 = sums[0], sums[1], sums[2], sums[3]

    n_f = jnp.float32(n)
    mae = sum_abs / n_f
    rmse = jnp.sqrt(ss_res / n_f)
    ss_tot = sum_ts2 - (sum_ts * sum_ts) / n_f
    safe_tot = jnp.where(ss_tot > 0.0, ss_tot, jnp.float32(1.0))
    # sklearn r2_score convention for constant targets: 1.0 if the prediction
    # is also exact (ss_res == 0), else 0.0.
    r2 = jnp.where(ss_tot > 0.0, 1.0 - ss_res / safe_tot,
                   jnp.where(ss_res == 0.0, jnp.float32(1.0), jnp.float32(0.0)))
    return mae, rmse, r2


def metrics_r_forward(out, tar, mae_f=True, rmse_f=True, r2_f=True):
    """Pallas equivalent of metrics_r.forward(out, tar).

    mae_f / rmse_f / r2_f mirror the "metric fn provided" flags of the original
    module (which leaves 0 for metrics whose fn is None).
    Returns (mae, rmse, r2, None, None).
    """
    out = jnp.asarray(out)
    tar = jnp.asarray(tar)
    if out.size == 0:
        mae_v = rmse_v = r2_v = jnp.float32(0.0)
    else:
        mae_v, rmse_v, r2_v = _metrics_impl(out, tar)
    mae = mae_v if mae_f else 0
    rmse = rmse_v if rmse_f else 0
    r2 = r2_v if r2_f else 0
    return (mae, rmse, r2, None, None)


def _reference_metrics(out, tar):
    out = jnp.asarray(out, jnp.float32).reshape(-1)
    tar = jnp.asarray(tar, jnp.float32).reshape(-1)
    d = tar - out
    mae = jnp.mean(jnp.abs(d))
    rmse = jnp.sqrt(jnp.mean(d * d))
    ss_res = jnp.sum(d * d)
    ss_tot = jnp.sum((tar - jnp.mean(tar)) ** 2)
    r2 = 1.0 - ss_res / ss_tot
    return mae, rmse, r2


def _check(out, tar, rtol, atol):
    mae, rmse, r2, _, _ = metrics_r_forward(out, tar)
    jax.block_until_ready((mae, rmse, r2))
    mae_ref, rmse_ref, r2_ref = _reference_metrics(out, tar)
    assert jnp.allclose(mae, mae_ref, rtol=rtol, atol=atol), (mae, mae_ref)
    assert jnp.allclose(rmse, rmse_ref, rtol=rtol, atol=atol), (rmse, rmse_ref)
    assert jnp.allclose(r2, r2_ref, rtol=rtol, atol=atol), (r2, r2_ref)


if __name__ == "__main__":
    key = jax.random.PRNGKey(0)

    # 1) Small unaligned 1-D regression batch: single block, grid=(1,1),
    #    exercises the lane-tail masking path.
    k1, k2 = jax.random.split(key)
    n = 300
    tar_s = jax.random.normal(k1, (n,), dtype=jnp.float32) * 2.0 + 1.0
    out_s = tar_s + 0.3 * jax.random.normal(k2, (n,), dtype=jnp.float32)
    _check(out_s, tar_s, rtol=1e-4, atol=1e-5)

    # 2) Offset-mean batch with an odd number of blocks: exercises the
    #    2-core split, the clamped duplicate block, the partial last block,
    #    and the shifted ss_tot accumulation (mean ~1000 >> std).
    k3, k4 = jax.random.split(k2)
    n2 = 2 * MAX_BLOCK_ROWS * LANES + 50
    tar_m = jax.random.normal(k3, (n2,), dtype=jnp.float32) * 2.0 + 1000.0
    out_m = tar_m + 0.3 * jax.random.normal(k4, (n2,), dtype=jnp.float32)
    _check(out_m, tar_m, rtol=2e-3, atol=1e-4)

    # 3) Exactly lane/block-aligned batch: zero wrapper-side copies,
    #    even 2-core split, no masking actually needed.
    k5, k6 = jax.random.split(k4)
    n3 = 4 * MAX_BLOCK_ROWS * LANES
    tar_l = jax.random.normal(k5, (n3,), dtype=jnp.float32)
    out_l = tar_l + 0.3 * jax.random.normal(k6, (n3,), dtype=jnp.float32)
    _check(out_l, tar_l, rtol=2e-3, atol=1e-4)

    print("KERNEL_OK")
</pallas_src>

<mosaic_0001>
module attributes {stable_mosaic.version = 11 : i64} {
  func.func @kernel(%arg0: i32, %arg1: i32, %arg2: memref<1xf32, #tpu.memory_space<smem>>, %arg3: memref<32x128xf32, #tpu.memory_space<vmem>>, %arg4: memref<32x128xf32, #tpu.memory_space<vmem>>, %arg5: memref<1x4x8x128xf32, #tpu.memory_space<vmem>>) attributes {dimension_semantics = [#tpu.dimension_semantics<parallel>, #tpu.dimension_semantics<arbitrary>], iteration_bounds = array<i64: 1, 1>, scalar_prefetch = 0 : i64, scratch_operands = 0 : i64, tpu.core_type = #tpu.core_type<tc>, window_params = [{transform_indices = @transform_0, window_bounds = array<i64: 1>}, {transform_indices = @transform_1, window_bounds = array<i64: 32, 128>}, {transform_indices = @transform_2, window_bounds = array<i64: 32, 128>}, {transform_indices = @transform_3, window_bounds = array<i64: 1, 4, 8, 128>}]} {
    %c0_i32 = arith.constant 0 : i32
    %0 = arith.cmpi eq, %arg1, %c0_i32 : i32
    %1 = arith.extui %0 : i1 to i32
    %c0_i32_0 = arith.constant 0 : i32
    %2 = arith.cmpi ne, %1, %c0_i32_0 : i32
    scf.if %2 {
      %cst_39 = arith.constant 0.000000e+00 : f32
      %60 = vector.broadcast %cst_39 : f32 to vector<4x8x128xf32>
      %c0_40 = arith.constant 0 : index
      %c0_41 = arith.constant 0 : index
      %c0_42 = arith.constant 0 : index
      %c0_43 = arith.constant 0 : index
      %61 = vector.load %arg5[%c0_40, %c0_41, %c0_42, %c0_43] : memref<1x4x8x128xf32, #tpu.memory_space<vmem>>, vector<1x4x8x128xf32>
      %62 = vector.shape_cast %61 : vector<1x4x8x128xf32> to vector<4x8x128xf32>
      %63 = vector.shape_cast %60 : vector<4x8x128xf32> to vector<1x4x8x128xf32>
      tpu.vector_store %arg5[%c0_40, %c0_41, %c0_42, %c0_43], %63 {strides = array<i32>} : memref<1x4x8x128xf32, #tpu.memory_space<vmem>>, vector<1x4x8x128xf32>,
    } else {
    }
    %c1_i32 = arith.constant 1 : i32
    %3 = arith.muli %arg0, %c1_i32 : i32
    %4 = arith.addi %3, %arg1 : i32
    %c4096_i32 = arith.constant 4096 : i32
    %5 = arith.muli %4, %c4096_i32 : i32
    %c0 = arith.constant 0 : index
    %c0_1 = arith.constant 0 : index
    %6 = vector.load %arg3[%c0, %c0_1] : memref<32x128xf32, #tpu.memory_space<vmem>>, vector<32x128xf32>
    %c0_2 = arith.constant 0 : index
    %c0_3 = arith.constant 0 : index
    %7 = vector.load %arg4[%c0_2, %c0_3] : memref<32x128xf32, #tpu.memory_space<vmem>>, vector<32x128xf32>
    %c0_4 = arith.constant 0 : index
    %8 = memref.load %arg2[%c0_4] : memref<1xf32, #tpu.memory_space<smem>>
    %9 = tpu.iota {dimensions = array<i32: 0>} : vector<32x128xi32>
    %10 = tpu.iota {dimensions = array<i32: 1>} : vector<32x128xi32>
    %c128_i32 = arith.constant 128 : i32
    %11 = vector.broadcast %c128_i32 : i32 to vector<32x128xi32>
    %12 = arith.muli %9, %11 : vector<32x128xi32>
    %13 = vector.broadcast %5 : i32 to vector<32x128xi32>
    %14 = arith.addi %13, %12 : vector<32x128xi32>
    %15 = arith.addi %14, %10 : vector<32x128xi32>
    %c300_i32 = arith.constant 300 : i32
    %16 = vector.broadcast %c300_i32 : i32 to vector<32x128xi32>
    %17 = arith.cmpi slt, %15, %16 : vector<32x128xi32>
    %18 = arith.subf %7, %6 : vector<32x128xf32>
    %cst = arith.constant 0.000000e+00 : f32
    %19 = vector.broadcast %cst : f32 to vector<32x128xf32>
    %20 = arith.select %17, %18, %19 : vector<32x128xi1>, vector<32x128xf32>
    %21 = vector.broadcast %8 : f32 to vector<32x128xf32>
    %22 = arith.subf %7, %21 : vector<32x128xf32>
    %cst_5 = arith.constant 0.000000e+00 : f32
    %23 = vector.broadcast %cst_5 : f32 to vector<32x128xf32>
    %24 = arith.select %17, %22, %23 : vector<32x128xi1>, vector<32x128xf32>
    %c0_6 = arith.constant 0 : index
    %c0_7 = arith.constant 0 : index
    %c0_8 = arith.constant 0 : index
    %c0_9 = arith.constant 0 : index
    %25 = vector.load %arg5[%c0_6, %c0_7, %c0_8, %c0_9] : memref<1x4x8x128xf32, #tpu.memory_space<vmem>>, vector<1x1x8x128xf32>
    %26 = vector.shape_cast %25 : vector<1x1x8x128xf32> to vector<8x128xf32>
    %27 = math.absf %20 : vector<32x128xf32>
    %28 = vector.shape_cast %27 : vector<32x128xf32> to vector<4x8x128xf32>
    %cst_10 = arith.constant dense<0.000000e+00> : vector<8x128xf32>
    %29 = vector.multi_reduction <add>, %28, %cst_10 [0] : vector<4x8x128xf32> to vector<8x128xf32>
    %30 = arith.addf %26, %29 : vector<8x128xf32>
    %c0_11 = arith.constant 0 : index
    %c0_12 = arith.constant 0 : index
    %c0_13 = arith.constant 0 : index
    %c0_14 = arith.constant 0 : index
    %31 = vector.load %arg5[%c0_11, %c0_12, %c0_13, %c0_14] : memref<1x4x8x128xf32, #tpu.memory_space<vmem>>, vector<1x1x8x128xf32>
    %32 = vector.shape_cast %31 : vector<1x1x8x128xf32> to vector<8x128xf32>
    %33 = vector.shape_cast %30 : vector<8x128xf32> to vector<1x1x8x128xf32>
    tpu.vector_store %arg5[%c0_11, %c0_12, %c0_13, %c0_14], %33 {strides = array<i32>} : memref<1x4x8x128xf32, #tpu.memory_space<vmem>>, vector<1x1x8x128xf32>,
    %c0_15 = arith.constant 0 : index
    %c1 = arith.constant 1 : index
    %c0_16 = arith.constant 0 : index
    %c0_17 = arith.constant 0 : index
    %34 = vector.load %arg5[%c0_15, %c1, %c0_16, %c0_17] : memref<1x4x8x128xf32, #tpu.memory_space<vmem>>, vector<1x1x8x128xf32>
    %35 = vector.shape_cast %34 : vector<1x1x8x128xf32> to vector<8x128xf32>
    %36 = arith.mulf %20, %20 : vector<32x128xf32>
    %37 = vector.shape_cast %36 : vector<32x128xf32> to vector<4x8x128xf32>
    %cst_18 = arith.constant dense<0.000000e+00> : vector<8x128xf32>
    %38 = vector.multi_reduction <add>, %37, %cst_18 [0] : vector<4x8x128xf32> to vector<8x128xf32>
    %39 = arith.addf %35, %38 : vector<8x128xf32>
    %c0_19 = arith.constant 0 : index
    %c1_20 = arith.constant 1 : index
    %c0_21 = arith.constant 0 : index
    %c0_22 = arith.constant 0 : index
    %40 = vector.load %arg5[%c0_19, %c1_20, %c0_21, %c0_22] : memref<1x4x8x128xf32, #tpu.memory_space<vmem>>, vector<1x1x8x128xf32>
    %41 = vector.shape_cast %40 : vector<1x1x8x128xf32> to vector<8x128xf32>
    %42 = vector.shape_cast %39 : vector<8x128xf32> to vector<1x1x8x128xf32>
    tpu.vector_store %arg5[%c0_19, %c1_20, %c0_21, %c0_22], %42 {strides = array<i32>} : memref<1x4x8x128xf32, #tpu.memory_space<vmem>>, vector<1x1x8x128xf32>,
    %c0_23 = arith.constant 0 : index
    %c2 = arith.constant 2 : index
    %c0_24 = arith.constant 0 : index
    %c0_25 = arith.constant 0 : index
    %43 = vector.load %arg5[%c0_23, %c2, %c0_24, %c0_25] : memref<1x4x8x128xf32, #tpu.memory_space<vmem>>, vector<1x1x8x128xf32>
    %44 = vector.shape_cast %43 : vector<1x1x8x128xf32> to vector<8x128xf32>
    %45 = vector.shape_cast %24 : vector<32x128xf32> to vector<4x8x128xf32>
    %cst_26 = arith.constant dense<0.000000e+00> : vector<8x128xf32>
    %46 = vector.multi_reduction <add>, %45, %cst_26 [0] : vector<4x8x128xf32> to vector<8x128xf32>
    %47 = arith.addf %44, %46 : vector<8x128xf32>
    %c0_27 = arith.constant 0 : index
    %c2_28 = arith.constant 2 : index
    %c0_29 = arith.constant 0 : index
    %c0_30 = arith.constant 0 : index
    %48 = vector.load %arg5[%c0_27, %c2_28, %c0_29, %c0_30] : memref<1x4x8x128xf32, #tpu.memory_space<vmem>>, vector<1x1x8x128xf32>
    %49 = vector.shape_cast %48 : vector<1x1x8x128xf32> to vector<8x128xf32>
    %50 = vector.shape_cast %47 : vector<8x128xf32> to vector<1x1x8x128xf32>
    tpu.vector_store %arg5[%c0_27, %c2_28, %c0_29, %c0_30], %50 {strides = array<i32>} : memref<1x4x8x128xf32, #tpu.memory_space<vmem>>, vector<1x1x8x128xf32>,
    %c0_31 = arith.constant 0 : index
    %c3 = arith.constant 3 : index
    %c0_32 = arith.constant 0 : index
    %c0_33 = arith.constant 0 : index
    %51 = vector.load %arg5[%c0_31, %c3, %c0_32, %c0_33] : memref<1x4x8x128xf32, #tpu.memory_space<vmem>>, vector<1x1x8x128xf32>
    %52 = vector.shape_cast %51 : vector<1x1x8x128xf32> to vector<8x128xf32>
    %53 = arith.mulf %24, %24 : vector<32x128xf32>
    %54 = vector.shape_cast %53 : vector<32x128xf32> to vector<4x8x128xf32>
    %cst_34 = arith.constant dense<0.000000e+00> : vector<8x128xf32>
    %55 = vector.multi_reduction <add>, %54, %cst_34 [0] : vector<4x8x128xf32> to vector<8x128xf32>
    %56 = arith.addf %52, %55 : vector<8x128xf32>
    %c0_35 = arith.constant 0 : index
    %c3_36 = arith.constant 3 : index
    %c0_37 = arith.constant 0 : index
    %c0_38 = arith.constant 0 : index
    %57 = vector.load %arg5[%c0_35, %c3_36, %c0_37, %c0_38] : memref<1x4x8x128xf32, #tpu.memory_space<vmem>>, vector<1x1x8x128xf32>
    %58 = vector.shape_cast %57 : vector<1x1x8x128xf32> to vector<8x128xf32>
    %59 = vector.shape_cast %56 : vector<8x128xf32> to vector<1x1x8x128xf32>
    tpu.vector_store %arg5[%c0_35, %c3_36, %c0_37, %c0_38], %59 {strides = array<i32>} : memref<1x4x8x128xf32, #tpu.memory_space<vmem>>, vector<1x1x8x128xf32>,
    return
  }
  func.func @transform_0(%arg0: i32, %arg1: i32) -> i32 {
    %c0_i32 = arith.constant 0 : i32
    %c0_i32_0 = arith.constant 0 : i32
    return %c0_i32 : i32
  }
  func.func @transform_1(%arg0: i32, %arg1: i32) -> (i32, i32) {
    %c1_i32 = arith.constant 1 : i32
    %0 = arith.muli %arg0, %c1_i32 : i32
    %1 = arith.addi %0, %arg1 : i32
    %c0_i32 = arith.constant 0 : i32
    %2 = arith.minsi %1, %c0_i32 : i32
    %c0_i32_0 = arith.constant 0 : i32
    %c0_i32_1 = arith.constant 0 : i32
    return %2, %c0_i32_0 : i32, i32
  }
  func.func @transform_2(%arg0: i32, %arg1: i32) -> (i32, i32) {
    %c1_i32 = arith.constant 1 : i32
    %0 = arith.muli %arg0, %c1_i32 : i32
    %1 = arith.addi %0, %arg1 : i32
    %c0_i32 = arith.constant 0 : i32
    %2 = arith.minsi %1, %c0_i32 : i32
    %c0_i32_0 = arith.constant 0 : i32
    %c0_i32_1 = arith.constant 0 : i32
    return %2, %c0_i32_0 : i32, i32
  }
  func.func @transform_3(%arg0: i32, %arg1: i32) -> (i32, i32, i32, i32) {
    %c0_i32 = arith.constant 0 : i32
    %c0_i32_0 = arith.constant 0 : i32
    %c0_i32_1 = arith.constant 0 : i32
    %c0_i32_2 = arith.constant 0 : i32
    return %arg0, %c0_i32, %c0_i32_0, %c0_i32_1 : i32, i32, i32, i32
  }
}

</mosaic_0001>

<llo_original>
// kernel: _metrics_impl.1
$region0: #{_metrics_impl.1}
  #allocation0 [shape = 'u32[]', space=smem, size = 0x4, offset = 0x4, fixed_abs, tag = 'smem constant byte address 0x4 - core index']
  #allocation1 [shape = 'u32[144,128]{1,0:T(1,128)}', space=vmem, size = 0x12000, scoped, tag = 'internal scratch']
  #allocation2 [shape = 'f32[1]{0:T(128)S(6)}', space=smem, size = 0x200, scoped, tag = 'scoped memory for _metrics_impl.1']
  %s0 = inlined_call_operand.<no memory space> [shape: f32[1], index: 0, kind: input, shape index: {}]
  %s1 = inlined_call_operand.vmem [shape: f32[3,128], index: 1, kind: input, shape index: {}]
  %s2 = inlined_call_operand.vmem [shape: f32[3,128], index: 2, kind: input, shape index: {}]
  %s3 = inlined_call_operand.vmem [shape: f32[1,4,8,128], index: 3, kind: output, shape index: {}]
  %s4 = sld [smem:[#allocation0]]
  $region26: #{_metrics_impl.1} parent=0
    _
  %s6 = ssub.s32 1, %s4
  %s7 = scalar_select 0, %s6, %s4
  %8 = sst [smem:[#allocation2]] %s0
  // Predicated region
  $region2: #{_metrics_impl.1} parent=0 // pred_check
    _
  $region3: #{_metrics_impl.1} parent=0 // pred_check_branch
    %10 = sbr.rel (0) target = $region5
  $region4: #{_metrics_impl.1} parent=0 // pred_region
    _
  $region5: #{_metrics_impl.1} parent=0 // pred_fallthru
    _
  // Predicated region
  $region6: #{_metrics_impl.1} parent=0 // pred_check
    _
  $region7: #{_metrics_impl.1} parent=0 // pred_check_branch
    %12 = sbr.rel (0) target = $region9
  $region8: #{_metrics_impl.1} parent=0 // pred_region
    %s13 = sadd.s32 0, 0
    %p14 = scmp.lt.s32.totalorder %s13, 0
    %s15 = scalar_select %p14, %s13, 0
    %s16 = smul.u32 8, %s15
    %s17 = ssub.s32 1, %s16
    %s18 = smul.u32 64, %s17
    %p19 = scmp.lt.s32.totalorder %s16, 0
    %s20 = scalar_select %p19, %s16, 0
    %s21 = smul.addr %s20, 4
    %s22 = scalar_lea.vmem %s1, %s21
    %s23 = sadd.s32 0, 0
    %p24 = scmp.lt.s32.totalorder %s23, 0
    %s25 = scalar_select %p24, %s23, 0
    %s26 = smul.u32 8, %s25
    %s27 = ssub.s32 1, %s26
    %s28 = smul.u32 64, %s27
  $region9: #{_metrics_impl.1} parent=0 // pred_fallthru
    _
  // Predicated region
  $region10: #{_metrics_impl.1} parent=0 // pred_check
    _
  $region11: #{_metrics_impl.1} parent=0 // pred_check_branch
    %30 = sbr.rel (0) target = $region13
  $region12: #{_metrics_impl.1} parent=0 // pred_region
    %s31 = sadd.s32 0, 0
    %p32 = scmp.lt.s32.totalorder %s31, 0
    %s33 = scalar_select %p32, %s31, 0
    %s34 = smul.u32 8, %s33
    %s35 = ssub.s32 1, %s34
    %s36 = smul.u32 64, %s35
    %p37 = scmp.lt.s32.totalorder %s34, 0
    %s38 = scalar_select %p37, %s34, 0
    %s39 = smul.addr %s38, 4
    %s40 = scalar_lea.vmem %s2, %s39
    %s41 = sadd.s32 0, 0
    %p42 = scmp.lt.s32.totalorder %s41, 0
    %s43 = scalar_select %p42, %s41, 0
    %s44 = smul.u32 8, %s43
    %s45 = ssub.s32 1, %s44
    %s46 = smul.u32 64, %s45
  $region13: #{_metrics_impl.1} parent=0 // pred_fallthru
    _
  %s47 = sadd.s32 0, 0
  %p48 = scmp.lt.s32.totalorder %s47, 0
  %s49 = scalar_select %p48, %s47, 0
  %s50 = smul.u32 8, %s49
  %s51 = ssub.s32 1, %s50
  %s52 = smul.u32 64, %s51
  %p53 = scmp.lt.s32.totalorder %s50, 0
  %s54 = scalar_select %p53, %s50, 0
  %s55 = smul.addr %s54, 4
  %s56 = scalar_lea.vmem %s1, %s55
  %s57 = sadd.s32 0, 0
  %p58 = scmp.lt.s32.totalorder %s57, 0
  %s59 = scalar_select %p58, %s57, 0
  %s60 = smul.u32 8, %s59
  %s61 = ssub.s32 1, %s60
  %s62 = smul.u32 64, %s61
  %p63 = scmp.lt.s32.totalorder %s60, 0
  %s64 = scalar_select %p63, %s60, 0
  %s65 = smul.addr %s64, 4
  %s66 = scalar_lea.vmem %s2, %s65
  %s67 = sadd.s32 0, 0
  %p68 = scmp.lt.s32.totalorder %s67, 0
  %s69 = scalar_select %p68, %s67, 0
  %s70 = smul.u32 8, %s69
  %s71 = ssub.s32 1, %s70
  %s72 = smul.u32 64, %s71
  %p73 = scmp.lt.s32.totalorder %s70, 0
  %s74 = scalar_select %p73, %s70, 0
  %s75 = smul.addr %s74, 4
  %s76 = scalar_lea.vmem %s1, %s75
  %s77 = sadd.s32 0, 0
  %p78 = scmp.lt.s32.totalorder %s77, 0
  %s79 = scalar_select %p78, %s77, 0
  %s80 = smul.u32 8, %s79
  %s81 = ssub.s32 1, %s80
  %s82 = smul.u32 64, %s81
  %s83 = sadd.s32 0, 0
  %p84 = scmp.lt.s32.totalorder %s83, 0
  %s85 = scalar_select %p84, %s83, 0
  %s86 = smul.u32 8, %s85
  %s87 = ssub.s32 1, %s86
  %s88 = smul.u32 64, %s87
  %p89 = scmp.lt.s32.totalorder %s86, 0
  %s90 = scalar_select %p89, %s86, 0
  %s91 = smul.addr %s90, 4
  %s92 = scalar_lea.vmem %s2, %s91
  %s93 = sadd.s32 0, 0
  %p94 = scmp.lt.s32.totalorder %s93, 0
  %s95 = scalar_select %p94, %s93, 0
  %s96 = smul.u32 8, %s95
  %s97 = ssub.s32 1, %s96
  %s98 = smul.u32 64, %s97
  %p99 = scmp.eq.s32.totalorder 0, 0
  // Predicated region
  $region14: #{_metrics_impl.1} parent=0 // pred_check
    %p100 = pneg %p99
  $region15: #{_metrics_impl.1} parent=0 // pred_check_branch
    %102 = sbr.rel (%p100) target = $region17
  $region16: #{_metrics_impl.1} parent=0 // pred_region
    %103 = vst [vmem:[%s3] sm:$0xff] 0.0
    %104 = vst [vmem:[%s3 + $0x8] sm:$0xff] 0.0
    %105 = vst [vmem:[%s3 + $0x10] sm:$0xff] 0.0
    %106 = vst [vmem:[%s3 + $0x18] sm:$0xff] 0.0
  $region17: #{_metrics_impl.1} parent=0 // pred_fallthru
    _
  %s107 = sadd.s32 0, 0
  %s108 = smul.u32 %s107, 4096
  %v109 = vld [vmem:[%s76] sm:$0xff]
  %v110 = vld [vmem:[%s76 + $0x8] sm:$0xff]
  %v111 = vld [vmem:[%s76 + $0x10] sm:$0xff]
  %v112 = vld [vmem:[%s76 + $0x18] sm:$0xff]
  %v113 = vld [vmem:[%s92] sm:$0xff]
  %v114 = vld [vmem:[%s92 + $0x8] sm:$0xff]
  %v115 = vld [vmem:[%s92 + $0x10] sm:$0xff]
  %v116 = vld [vmem:[%s92 + $0x18] sm:$0xff]
  %s117 = sld [smem:[#allocation2]]
  %v118 = vlaneseq
  %v119 = vshrl.u32 %v118, 7
  %v120 = vadd.s32 %v119, 8
  %v121 = vadd.s32 %v119, 16
  %v122 = vadd.s32 %v119, 24
  %v123 = vlaneseq
  %v124 = vand.u32 %v123, 127
  %v125 = vmul.u32 %v119, 128
  %v126 = vmul.u32 %v120, 128
  %v127 = vmul.u32 %v121, 128
  %v128 = vmul.u32 %v122, 128
  %v129 = vstv %s108
  %v130 = vadd.s32 %v129, %v125
  %v131 = vadd.s32 %v129, %v126
  %v132 = vadd.s32 %v129, %v127
  %v133 = vadd.s32 %v129, %v128
  %v134 = vadd.s32 %v130, %v124
  %v135 = vadd.s32 %v131, %v124
  %v136 = vadd.s32 %v132, %v124
  %v137 = vadd.s32 %v133, %v124
  %vm138 = vcmp.lt.s32.totalorder %v134, 300
  %vm139 = vcmp.lt.s32.totalorder %v135, 300
  %vm140 = vcmp.lt.s32.totalorder %v136, 300
  %vm141 = vcmp.lt.s32.totalorder %v137, 300
  %v142 = vsub.f32 %v113, %v109
  %v143 = vsub.f32 %v114, %v110
  %v144 = vsub.f32 %v115, %v111
  %v145 = vsub.f32 %v116, %v112
  %v146 = vsel %vm138, %v142, 0.0
  %v147 = vsel %vm139, %v143, 0.0
  %v148 = vsel %vm140, %v144, 0.0
  %v149 = vsel %vm141, %v145, 0.0
  %v150 = vstv %s117
  %v151 = vsub.f32 %v113, %v150
  %v152 = vsub.f32 %v114, %v150
  %v153 = vsub.f32 %v115, %v150
  %v154 = vsub.f32 %v116, %v150
  %v155 = vsel %vm138, %v151, 0.0
  %v156 = vsel %vm139, %v152, 0.0
  %v157 = vsel %vm140, %v153, 0.0
  %v158 = vsel %vm141, %v154, 0.0
  %v159 = vld [vmem:[%s3] sm:$0xff]
  %v160 = vand.u32 2147483647, %v146
  %v161 = vand.u32 2147483647, %v147
  %v162 = vand.u32 2147483647, %v148
  %v163 = vand.u32 2147483647, %v149
  %v164 = vadd.f32 %v160, %v161
  %v165 = vadd.f32 %v164, %v162
  %v166 = vadd.f32 %v165, %v163
  %v167 = vadd.f32 %v159, %v166
  %168 = vst [vmem:[%s3] sm:$0xff] %v167
  %s169 = scalar_lea.vmem %s3, 8
  %v170 = vld [vmem:[%s169] sm:$0xff]
  %v171 = vmul.f32 %v146, %v146
  %v172 = vmul.f32 %v147, %v147
  %v173 = vmul.f32 %v148, %v148
  %v174 = vmul.f32 %v149, %v149
  %v175 = vadd.f32 %v171, %v172
  %v176 = vadd.f32 %v175, %v173
  %v177 = vadd.f32 %v176, %v174
  %v178 = vadd.f32 %v170, %v177
  %179 = vst [vmem:[%s169] sm:$0xff] %v178
  %s180 = scalar_lea.vmem %s3, 16
  %v181 = vld [vmem:[%s180] sm:$0xff]
  %v182 = vadd.f32 %v155, %v156
  %v183 = vadd.f32 %v182, %v157
  %v184 = vadd.f32 %v183, %v158
  %v185 = vadd.f32 %v181, %v184
  %186 = vst [vmem:[%s180] sm:$0xff] %v185
  %s187 = scalar_lea.vmem %s3, 24
  %v188 = vld [vmem:[%s187] sm:$0xff]
  %v189 = vmul.f32 %v155, %v155
  %v190 = vmul.f32 %v156, %v156
  %v191 = vmul.f32 %v157, %v157
  %v192 = vmul.f32 %v158, %v158
  %v193 = vadd.f32 %v189, %v190
  %v194 = vadd.f32 %v193, %v191
  %v195 = vadd.f32 %v194, %v192
  %v196 = vadd.f32 %v188, %v195
  %197 = vst [vmem:[%s187] sm:$0xff] %v196
  // Predicated region
  $region18: #{_metrics_impl.1} parent=0 // pred_check
    _
  $region19: #{_metrics_impl.1} parent=0 // pred_check_branch
    %199 = sbr.rel (0) target = $region21
  $region20: #{_metrics_impl.1} parent=0 // pred_region
    _
  $region21: #{_metrics_impl.1} parent=0 // pred_fallthru
    _
  // Predicated region
  $region22: #{_metrics_impl.1} parent=0 // pred_check
    _
  $region23: #{_metrics_impl.1} parent=0 // pred_check_branch
    %201 = sbr.rel (0) target = $region25
  $region24: #{_metrics_impl.1} parent=0 // pred_region
    _
  $region25: #{_metrics_impl.1} parent=0 // pred_fallthru
    _

</llo_original>
